<compile_context>
chip_gen: v7x
topology: tpu7x:2x2x1
jax: 0.10.0
libtpu: 0.0.40
codegen_flags: <defaults>
</compile_context>

<pallas_src>
import functools

import jax
import jax.numpy as jnp
import numpy as np
from jax.experimental import pallas as pl
from jax.experimental.pallas import tpu as pltpu


# MXU operand dtype.  bf16 operands halve resident-weight VMEM and HBM read
# traffic and run the MXU at its full bf16 rate on v5e/v6e/v7x; accumulation
# stays f32 via preferred_element_type.  Set to None for strict f32 parity.
_MXU_DTYPE = jnp.bfloat16


def _to_mxu(x):
    if _MXU_DTYPE is not None and x.dtype == jnp.float32:
        return x.astype(_MXU_DTYPE)
    return x


@functools.lru_cache(maxsize=None)
def _vmem_limit_bytes():
    """Per-generation scoped-VMEM budget (~75% of physical VMEM)."""
    cap = 64 * 1024 * 1024                        # conservative (v7x) fallback
    try:
        info = pltpu.get_tpu_info()
        cap = int(getattr(info, "vmem_capacity_bytes", cap)) or cap
    except Exception:                             # info unavailable -> fallback
        pass
    # ~96 MiB on v5e/v6e (128 MiB physical), ~48 MiB on v7x (64 MiB physical).
    return (cap * 3) // 4


# ---------------------------------------------------------------------------
# Kernel 1 & 3: dense linear layer  y = x @ W + b  (qkv and output projection)
# ---------------------------------------------------------------------------
def _linear_kernel(x_ref, w_ref, b_ref, o_ref):
    x = _to_mxu(x_ref[...])                       # cast at the MXU boundary
    acc = jnp.dot(x, w_ref[...], preferred_element_type=jnp.float32)
    o_ref[...] = (acc + b_ref[...]).astype(o_ref.dtype)


def pallas_linear(x2d, w, b, out_dtype=None):
    """y = x2d @ w + b.   x2d: (M, K), w: (K, N), b: (N,) -> (M, N)."""
    M, K = x2d.shape
    N = w.shape[1]
    out_dtype = out_dtype or x2d.dtype

    wm = _to_mxu(w)                               # weight is reused -> cast once
    bf = b.astype(jnp.float32).reshape(1, N)

    x_bytes = x2d.dtype.itemsize
    w_bytes = wm.dtype.itemsize
    o_bytes = np.dtype(out_dtype).itemsize

    budget = _vmem_limit_bytes()
    usable = int(budget * 0.8)                    # headroom for compiler temps

    def vmem_need(tm_, tn_):
        return (2 * tm_ * K * x_bytes             # x tile   (double-buffered)
                + 2 * K * tn_ * w_bytes           # W tile
                + 2 * tn_ * 4                     # bias tile
                + 2 * tm_ * tn_ * o_bytes)        # out tile

    # Row tile: start large (amortizes the ~0.35us per-grid-step overhead),
    # shrink until the working set fits the per-generation budget.
    tn = N
    tm = min(2048, M)
    while tm > 128 and vmem_need(tm, tn) > usable:
        tm //= 2
    # Column tiling: needed (esp. v7x) when the full-width weight cannot stay
    # resident next to the double-buffered x/out tiles.
    if vmem_need(tm, tn) > usable:
        for cand in (4096, 2048, 1024, 512, 256, 128):
            if cand < N and N % cand == 0:
                tn = cand
                if vmem_need(tm, tn) <= usable:
                    break
        while tm > 8 and vmem_need(tm, tn) > usable:
            tm //= 2
    tm = min(tm, M)
    if tm < M and tm % 8:
        tm = max(8, (tm // 8) * 8)

    grid_m = pl.cdiv(M, tm)
    grid_n = pl.cdiv(N, tn)

    return pl.pallas_call(
        _linear_kernel,
        out_shape=jax.ShapeDtypeStruct((M, N), out_dtype),
        grid=(grid_m, grid_n),
        in_specs=[
            pl.BlockSpec((tm, K), lambda i, j: (i, 0)),   # x row tile
            pl.BlockSpec((K, tn), lambda i, j: (0, j)),   # weight column tile
            pl.BlockSpec((1, tn), lambda i, j: (0, j)),   # bias column tile
        ],
        out_specs=pl.BlockSpec((tm, tn), lambda i, j: (i, j)),  # lane-dense
        compiler_params=pltpu.CompilerParams(
            dimension_semantics=("parallel", "parallel"),
            vmem_limit_bytes=budget),
    )(x2d, wm, bf)


# ---------------------------------------------------------------------------
# Kernel 2: LayerNorm(q/k) + scaled-dot-product attention,
# one (batch, head) pair per grid step.
# ---------------------------------------------------------------------------
def _attn_head_kernel(q_ref, k_ref, v_ref, gq_ref, bq_ref, gk_ref, bk_ref,
                      o_ref, *, eps):
    f32 = jnp.float32

    def layer_norm(t, gamma, beta):
        mu = jnp.mean(t, axis=-1, keepdims=True)
        var = jnp.mean(jnp.square(t - mu), axis=-1, keepdims=True)
        return (t - mu) * jax.lax.rsqrt(var + eps) * gamma + beta

    # LayerNorm statistics in f32; the 1/sqrt(hd) attention scale is already
    # folded into the q-side affine (gamma_q, beta_q) on the host.
    # TODO(synk): for hd < 128 the LN path is lane-sparse; a lane-dense packed
    # LN (2 heads per vreg) would roughly double VPU/XLU throughput here.
    q = q_ref[0, 0].astype(f32)                                   # (n, hd)
    k = k_ref[0, 0].astype(f32)
    qn = _to_mxu(layer_norm(q, gq_ref[...], bq_ref[...]))
    kn = _to_mxu(layer_norm(k, gk_ref[...], bk_ref[...]))

    # Scores for THIS head only: (n, n) with f32 MXU accumulation.
    s = jax.lax.dot_general(qn, kn, (((1,), (1,)), ((), ())),
                            preferred_element_type=f32)
    m = jnp.max(s, axis=-1, keepdims=True)
    p = jnp.exp(s - m)                                            # f32
    denom = jnp.sum(p, axis=-1, keepdims=True)                    # (n, 1)
    # TODO(synk): attention dropout omitted (p = 0.0 default -> identity).

    # Unnormalized PV product; normalize the small (n, hd) result with an EUP
    # reciprocal instead of dividing the (n, n) score matrix.
    o_un = jnp.dot(_to_mxu(p), _to_mxu(v_ref[0, 0]),
                   preferred_element_type=f32)                    # (n, hd)
    o_ref[0, 0] = (o_un * pl.reciprocal(denom, approx=True)).astype(o_ref.dtype)
    # TODO(synk): for very long sequences (n^2 f32 per head approaching the
    # VMEM budget) add flash-style KV-axis inner tiling with online softmax.


def pallas_attention(qkv4, gamma_q, beta_q, gamma_k, beta_k, *, batch,
                     num_heads, seq, head_dim, out_dtype, eps=1e-5):
    b, H, n, hd = batch, num_heads, seq, head_dim
    kernel = functools.partial(_attn_head_kernel, eps=eps)

    def slab_spec(offset):
        # q / k / v slab of the flat (3*b, H, n, hd) qkv buffer; one
        # (batch, head) slice per grid step -> no HBM copies of q/k/v.
        def index_map(bi, h):
            return (offset + bi, h, 0, 0)
        return pl.BlockSpec((1, 1, n, hd), index_map)

    vec_spec = pl.BlockSpec((1, hd), lambda bi, h: (0, 0))

    return pl.pallas_call(
        kernel,
        out_shape=jax.ShapeDtypeStruct((b, H, n, hd), out_dtype),
        grid=(b, H),
        in_specs=[
            slab_spec(0),          # q slab
            slab_spec(b),          # k slab
            slab_spec(2 * b),      # v slab
            vec_spec, vec_spec,    # gamma_q, beta_q (scale folded in)
            vec_spec, vec_spec,    # gamma_k, beta_k
        ],
        out_specs=pl.BlockSpec((1, 1, n, hd), lambda bi, h: (bi, h, 0, 0)),
        compiler_params=pltpu.CompilerParams(
            dimension_semantics=("parallel", "parallel"),
            vmem_limit_bytes=_vmem_limit_bytes()),
    )(qkv4, qkv4, qkv4, gamma_q, beta_q, gamma_k, beta_k)


# ---------------------------------------------------------------------------
# Full AttentionBlock forward (fused_attn=True path)
# ---------------------------------------------------------------------------
def attention_block_forward(x, w_qkv, b_qkv, ln_gamma, ln_beta, w_out, b_out,
                            *, num_heads):
    b, n, c = x.shape
    hd = c // num_heads
    scale = hd ** (-0.5)
    f32 = jnp.float32

    # 1) qkv projection (tiled Pallas matmul).
    qkv = pallas_linear(x.reshape(b * n, c), w_qkv, b_qkv)        # (b*n, 3c)

    # Faithful to torch: flat row-major reinterpretation of the (b, n, 3c)
    # buffer as (3, b, H, n, hd); kept as a single free reshape — the q/k/v
    # slabs are selected per grid step by the BlockSpec index_maps.
    qkv4 = qkv.reshape(3 * b, num_heads, n, hd)

    # Fold the 1/sqrt(hd) attention scale into the q-side LayerNorm affine.
    gamma_q = (ln_gamma.astype(f32) * scale).reshape(1, hd)
    beta_q = (ln_beta.astype(f32) * scale).reshape(1, hd)
    gamma_k = ln_gamma.astype(f32).reshape(1, hd)
    beta_k = ln_beta.astype(f32).reshape(1, hd)

    # 2) LayerNorm + attention, one (batch, head) tile per grid step.
    attn = pallas_attention(
        qkv4, gamma_q, beta_q, gamma_k, beta_k,
        batch=b, num_heads=num_heads, seq=n, head_dim=hd,
        out_dtype=x.dtype)                                        # (b, H, n, hd)

    # 3) Head concat (torch's `x.transpose(1, 2).reshape(b, n, c)`) as a
    #    plain XLA transpose, then ONE full-depth (c-deep) output projection.
    # TODO(synk): for small H*n this transpose + projection could be fused
    # back into kernel 2 to avoid the extra HBM round trip.
    attn_cat = attn.transpose(0, 2, 1, 3).reshape(b * n, c)
    out = pallas_linear(attn_cat, w_out, b_out)                   # (b*n, c)
    # out_drop is identity at p = 0.0.
    return out.reshape(b, n, c)


if __name__ == "__main__":
    # small shapes consistent with the module
    batch, seq, dim, num_heads = 2, 8, 32, 4
    head_dim = dim // num_heads

    key = jax.random.PRNGKey(0)
    kx, kw1, kb1, kw2, kb2 = jax.random.split(key, 5)

    x = jax.random.normal(kx, (batch, seq, dim), jnp.float32)

    # deterministic parameter init (synthetic weights, stored as (in, out))
    w_qkv = jax.random.normal(kw1, (dim, 3 * dim), jnp.float32) * 0.02
    b_qkv = jax.random.normal(kb1, (3 * dim,), jnp.float32) * 0.02
    w_out = jax.random.normal(kw2, (dim, dim), jnp.float32) * 0.02
    b_out = jax.random.normal(kb2, (dim,), jnp.float32) * 0.02
    ln_gamma = jnp.ones((head_dim,), jnp.float32)   # nn.LayerNorm default
    ln_beta = jnp.zeros((head_dim,), jnp.float32)

    out = attention_block_forward(
        x, w_qkv, b_qkv, ln_gamma, ln_beta, w_out, b_out, num_heads=num_heads)
    jax.block_until_ready(out)

    assert out.shape == (batch, seq, dim), out.shape
    assert bool(jnp.all(jnp.isfinite(out)))
    print("KERNEL_OK")
</pallas_src>

<mosaic_0001>
module attributes {stable_mosaic.version = 11 : i64} {
  func.func @_linear_kernel(%arg0: i32, %arg1: i32, %arg2: memref<16x32xf32, #tpu.memory_space<vmem>>, %arg3: memref<32x96xbf16, #tpu.memory_space<vmem>>, %arg4: memref<1x96xf32, #tpu.memory_space<vmem>>, %arg5: memref<16x96xf32, #tpu.memory_space<vmem>>) attributes {dimension_semantics = [#tpu.dimension_semantics<parallel>, #tpu.dimension_semantics<parallel>], iteration_bounds = array<i64: 1, 1>, scalar_prefetch = 0 : i64, scratch_operands = 0 : i64, tpu.core_type = #tpu.core_type<tc>, window_params = [{transform_indices = @transform_0, window_bounds = array<i64: 16, 32>}, {transform_indices = @transform_1, window_bounds = array<i64: 32, 96>}, {transform_indices = @transform_2, window_bounds = array<i64: 1, 96>}, {transform_indices = @transform_3, window_bounds = array<i64: 16, 96>}]} {
    %c0 = arith.constant 0 : index
    %c0_0 = arith.constant 0 : index
    %0 = vector.load %arg2[%c0, %c0_0] : memref<16x32xf32, #tpu.memory_space<vmem>>, vector<16x32xf32>
    %1 = arith.truncf %0 : vector<16x32xf32> to vector<16x32xbf16>
    %c0_1 = arith.constant 0 : index
    %c0_2 = arith.constant 0 : index
    %2 = vector.load %arg3[%c0_1, %c0_2] : memref<32x96xbf16, #tpu.memory_space<vmem>>, vector<32x96xbf16>
    %cst = arith.constant dense<0.000000e+00> : vector<16x96xf32>
    %3 = tpu.matmul %1, %2, %cst {dimension_numbers = #tpu.dot_dimension_numbers<[1], [0], [0], [1], [0, 0, 1, 1], [], []>} : vector<16x32xbf16>, vector<32x96xbf16>, vector<16x96xf32> -> vector<16x96xf32>
    %c0_3 = arith.constant 0 : index
    %c0_4 = arith.constant 0 : index
    %4 = vector.load %arg4[%c0_3, %c0_4] : memref<1x96xf32, #tpu.memory_space<vmem>>, vector<1x96xf32>
    %5 = vector.broadcast %4 : vector<1x96xf32> to vector<16x96xf32>
    %6 = arith.addf %3, %5 : vector<16x96xf32>
    %c0_5 = arith.constant 0 : index
    %c0_6 = arith.constant 0 : index
    %7 = vector.load %arg5[%c0_5, %c0_6] : memref<16x96xf32, #tpu.memory_space<vmem>>, vector<16x96xf32>
    tpu.vector_store %arg5[%c0_5, %c0_6], %6 {strides = array<i32>} : memref<16x96xf32, #tpu.memory_space<vmem>>, vector<16x96xf32>,
    return
  }
  func.func @transform_0(%arg0: i32, %arg1: i32) -> (i32, i32) {
    %c0_i32 = arith.constant 0 : i32
    %c0_i32_0 = arith.constant 0 : i32
    return %arg0, %c0_i32 : i32, i32
  }
  func.func @transform_1(%arg0: i32, %arg1: i32) -> (i32, i32) {
    %c0_i32 = arith.constant 0 : i32
    %c0_i32_0 = arith.constant 0 : i32
    return %c0_i32, %arg1 : i32, i32
  }
  func.func @transform_2(%arg0: i32, %arg1: i32) -> (i32, i32) {
    %c0_i32 = arith.constant 0 : i32
    %c0_i32_0 = arith.constant 0 : i32
    return %c0_i32, %arg1 : i32, i32
  }
  func.func @transform_3(%arg0: i32, %arg1: i32) -> (i32, i32) {
    %c0_i32 = arith.constant 0 : i32
    return %arg0, %arg1 : i32, i32
  }
}

</mosaic_0001>

<llo_original>
// kernel: tpu_custom_call.1
$region0: #{tpu_custom_call.1}
  #allocation0 [shape = 'u32[]', space=smem, size = 0x4, offset = 0x4, fixed_abs, tag = 'smem constant byte address 0x4 - core index']
  #allocation1 [shape = 'u32[144,128]{1,0:T(1,128)}', space=vmem, size = 0x12000, scoped, tag = 'internal scratch']
  %s0 = inlined_call_operand.hbm [shape: f32[16,32], index: 0, kind: input, shape index: {}]
  %s1 = inlined_call_operand.hbm [shape: bf16[32,96], index: 1, kind: input, shape index: {}]
  %s2 = inlined_call_operand.vmem [shape: f32[1,96], index: 2, kind: input, shape index: {}]
  %s3 = inlined_call_operand.hbm [shape: f32[16,96], index: 3, kind: output, shape index: {}]
  %s4 = sld [smem:[#allocation0]]
  $region30: #{tpu_custom_call.1} parent=0
    _
  %s6 = ssub.s32 1, %s4
  %s7 = scalar_select 0, %s6, %s4
  $region1: #{tpu_custom_call.1} parent=0
    #allocation2 [shape = 'u8[8192]{0}', space=vmem, size = 0x2000, scoped, tag = 'input window, operand 0, single buffered']
    #allocation3 [shape = 's32[1]{0}', space=sflag, size = 0x4, scoped, tag = 'scoped memory for tpu_custom_call.1']
    #allocation4 [shape = 's32[1]{0}', space=sflag, size = 0x4, scoped, tag = 'scoped memory for tpu_custom_call.1']
    #allocation5 [shape = 'u8[8192]{0}', space=vmem, size = 0x2000, scoped, tag = 'input window, operand 1, single buffered']
    #allocation6 [shape = 's32[1]{0}', space=sflag, size = 0x4, scoped, tag = 'scoped memory for tpu_custom_call.1']
    #allocation7 [shape = 'u8[8192]{0}', space=vmem, size = 0x2000, scoped, tag = 'output window, operand 0, single buffered']
    %8 = vsyncpa [#allocation3], 0
    %9 = vsyncpa [#allocation6], 0
    %10 = vsyncpa [#allocation4], 0
    // Predicated region
    $region2: #{tpu_custom_call.1} parent=1 // pred_check
      _
    $region3: #{tpu_custom_call.1} parent=1 // pred_check_branch
      %12 = sbr.rel (0) target = $region5
    $region4: #{tpu_custom_call.1} parent=1 // pred_region
      %s14 = ssub.s32 256, 256
      %15 = vsyncadd [#allocation3], %s14
      %s16 = sshll.u32 [#allocation2], 4
      %s17 = int_to_ptr.vmem [resolvable:$true] %s16
      %22 = dma.hbm_to_vmem [thread:$0]  %s0, 256, %s17, [#allocation3], 128, 128, 8
    $region5: #{tpu_custom_call.1} parent=1 // pred_fallthru
      _
    // Predicated region
    $region6: #{tpu_custom_call.1} parent=1 // pred_check
      _
    $region7: #{tpu_custom_call.1} parent=1 // pred_check_branch
      %24 = sbr.rel (0) target = $region9
    $region8: #{tpu_custom_call.1} parent=1 // pred_region
      %s26 = ssub.s32 256, 256
      %27 = vsyncadd [#allocation6], %s26
      %s28 = sshll.u32 [#allocation5], 4
      %s29 = int_to_ptr.vmem [resolvable:$true] %s28
      %34 = dma.hbm_to_vmem [thread:$0]  %s1, 256, %s29, [#allocation6], 64, 64, 4
    $region9: #{tpu_custom_call.1} parent=1 // pred_fallthru
      _
    // Predicated region
    $region10: #{tpu_custom_call.1} parent=1 // pred_check
      _
    $region11: #{tpu_custom_call.1} parent=1 // pred_check_branch
      %36 = sbr.rel (0) target = $region13
    $region12: #{tpu_custom_call.1} parent=1 // pred_region
      _
    $region13: #{tpu_custom_call.1} parent=1 // pred_fallthru
      _
    // Predicated region
    $region14: #{tpu_custom_call.1} parent=1 // pred_check
      _
    $region15: #{tpu_custom_call.1} parent=1 // pred_check_branch
      %38 = sbr.rel (0) target = $region17
    $region16: #{tpu_custom_call.1} parent=1 // pred_region
      %39 = dma.done [#allocation3], 256
    $region17: #{tpu_custom_call.1} parent=1 // pred_fallthru
      _
    // Predicated region
    $region18: #{tpu_custom_call.1} parent=1 // pred_check
      _
    $region19: #{tpu_custom_call.1} parent=1 // pred_check_branch
      %41 = sbr.rel (0) target = $region21
    $region20: #{tpu_custom_call.1} parent=1 // pred_region
      %42 = dma.done [#allocation6], 256
    $region21: #{tpu_custom_call.1} parent=1 // pred_fallthru
      _
    %v44 = vld [vmem:[#allocation2] sm:$0xff]
    %v45 = vld [vmem:[#allocation2 + $0x8] sm:$0xff]
    %v46 = vpack.c.bf16 %v45, %v44
    %v47 = vld [vmem:[#allocation5] sm:$0xf]
    %v48 = vld [vmem:[#allocation5 + $0x4] sm:$0xf]
    %v49 = vld [vmem:[#allocation5 + $0x8] sm:$0xf]
    %v50 = vld [vmem:[#allocation5 + $0xc] sm:$0xf]
    %v51 = vld [vmem:[%s2] sm:$0x1]
    %v53 = vlaneseq
    %v54 = vshrl.u32 %v53, 7
    %v55 = vsub.s32 0, %v54
    %v56 = vrot.slane %v51, %v55
    %v62 = vunpack.c.l.b16 %v47
    %v63 = vunpack.c.l.b16 %v48
    %v64 = vunpack.c.l.b16 %v49
    %v65 = vunpack.c.l.b16 %v50
    %v66 = vpack.c.b16 %v63, %v62
    %v67 = vpack.c.b16 %v65, %v64
    %vm70 = vcmask 261120
    %v72 = vsel %vm70, %v46, 0
    %74 = vmatprep.subr.bf16.mxu0 0
    %75 = vmatpush1.bf16.msra.mxu0 %v66
    %76 = vmatprep.subr.bf16.mxu0 0
    %77 = vmatpush1.bf16.msra.mxu0 %v67
    %78 = vmatprep.subr.bf16.mxu0 0
    %79 = vmatpush1.bf16.msra.mxu0 0
    %80 = vmatprep.subr.bf16.mxu0 0
    %81 = vmatpush1.bf16.msra.mxu0 0
    %82 = vmatprep.subr.bf16.mxu0 0
    %83 = vmatpush1.bf16.msra.mxu0 0
    %84 = vmatprep.subr.bf16.mxu0 0
    %85 = vmatpush1.bf16.msra.mxu0 0
    %86 = vmatprep.subr.bf16.mxu0 0
    %87 = vmatpush1.bf16.msra.mxu0 0
    %88 = vmatprep.subr.bf16.mxu0 0
    %89 = vmatpush1.bf16.msra.mxu0 0
    %90 = vmatprep.subr.bf16.mxu0 0
    %91 = vmatpush1.bf16.msra.mxu0 0
    %92 = vmatprep.subr.bf16.mxu0 0
    %93 = vmatpush1.bf16.msra.mxu0 0
    %94 = vmatprep.subr.bf16.mxu0 0
    %95 = vmatpush1.bf16.msra.mxu0 0
    %96 = vmatprep.subr.bf16.mxu0 0
    %97 = vmatpush1.bf16.msra.mxu0 0
    %98 = vmatprep.subr.bf16.mxu0 0
    %99 = vmatpush1.bf16.msra.mxu0 0
    %100 = vmatprep.subr.bf16.mxu0 0
    %101 = vmatpush1.bf16.msra.mxu0 0
    %102 = vmatprep.subr.bf16.mxu0 0
    %103 = vmatpush1.bf16.msra.mxu0 0
    %104 = vmatprep.subr.bf16.mxu0 0
    %105 = vmatpush1.bf16.msra.mxu0 0
    %106 = vmatprep.mubr.bf16.mxu0 0
    %107 = vmatmul.mubr.bf16.gmra.mrb[0].mxu0 %v72
    %v108 = vpop.f32.mrb[0].mxu0
    %v109 = vadd.f32 %v56, %v108
    %v110 = vpop.f32.mrb[0].mxu0
    %v111 = vpop.f32.mrb[0].mxu0
    %v112 = vadd.f32 %v56, %v111
    %v113 = vpop.f32.mrb[0].mxu0
    %114 = vdwg.mxu0
    %vm115 = vcmask 785408
    %116 = vst.msk [vmem:[#allocation7] sm:$0xff] %vm115, %v109
    %117 = vst.msk [vmem:[#allocation7 + $0x8] sm:$0xff] %vm115, %v112
    // Predicated region
    $region22: #{tpu_custom_call.1} parent=1 // pred_check
      _
    $region23: #{tpu_custom_call.1} parent=1 // pred_check_branch
      %119 = sbr.rel (0) target = $region25
    $region24: #{tpu_custom_call.1} parent=1 // pred_region
      %s121 = ssub.s32 256, 256
      %122 = vsyncadd [#allocation4], %s121
      %s123 = sshll.u32 [#allocation7], 4
      %s124 = int_to_ptr.vmem [resolvable:$true] %s123
      %129 = dma.vmem_to_hbm [thread:$0]  %s124, 256, %s3, [#allocation4], 128, 128, 8
    $region25: #{tpu_custom_call.1} parent=1 // pred_fallthru
      _
    // Predicated region
    $region26: #{tpu_custom_call.1} parent=1 // pred_check
      _
    $region27: #{tpu_custom_call.1} parent=1 // pred_check_branch
      %131 = sbr.rel (0) target = $region29
    $region28: #{tpu_custom_call.1} parent=1 // pred_region
      %132 = dma.done [#allocation4], 256
    $region29: #{tpu_custom_call.1} parent=1 // pred_fallthru
      _
    %133 = vsyncpa [#allocation3], 1
    %134 = vsyncpa [#allocation6], 1
    %135 = vsyncpa [#allocation4], 1

</llo_original>
